<compile_context>
chip_gen: v6e
topology: v6e:2x2x1
jax: 0.10.0
libtpu: 0.0.40
codegen_flags: <defaults>
</compile_context>

<pallas_src>
import jax
import jax.numpy as jnp
from jax.experimental import pallas as pl
from jax.experimental.pallas import tpu as pltpu


def _unembed_kernel(x_ref, o_ref):
    # x_ref: (L_TILE, C)  ->  o_ref: (C, L_TILE)
    o_ref[...] = jnp.transpose(x_ref[...], (1, 0))


def _pick_l_tile(L, max_tile=2048):
    """Largest lane-aligned (multiple-of-128) divisor of L, capped at max_tile.

    Falls back to the full extent when L is not 128-aligned (still legal for
    the (8,128) BlockSpec constraint because block == full dim)."""
    if L % 128 == 0:
        t = min(L, max_tile)
        while L % t != 0:
            t -= 128
        return t
    return L


def patch_unembed(x, x_size):
    """x: (B, H*W, C) -> (B, C, H, W), matching PatchUnEmbed.forward."""
    B, L, C = x.shape
    H, W = x_size
    assert L == H * W, "sequence length must equal H*W"

    l_tile = _pick_l_tile(L)
    grid = (B, L // l_tile)

    out_bcl = pl.pallas_call(
        _unembed_kernel,
        out_shape=jax.ShapeDtypeStruct((B, C, L), x.dtype),
        grid=grid,
        in_specs=[pl.BlockSpec((None, l_tile, C), lambda b, l: (b, l, 0))],
        out_specs=pl.BlockSpec((None, C, l_tile), lambda b, l: (b, 0, l)),
        compiler_params=pltpu.CompilerParams(
            dimension_semantics=("parallel", "parallel")),
    )(x)
    # Row-major reshape (B, C, L) -> (B, C, H, W): free, no data movement.
    return out_bcl.reshape(B, C, H, W)


if __name__ == "__main__":
    # Small shapes consistent with the module: embed_dim=48, 16x16 spatial, B=2.
    B, H, W, C = 2, 16, 16, 48
    key = jax.random.PRNGKey(0)
    x = jax.random.normal(key, (B, H * W, C), jnp.float32)

    run = jax.jit(lambda t: patch_unembed(t, (H, W)))
    out = run(x)
    jax.block_until_ready(out)

    ref = jnp.transpose(x, (0, 2, 1)).reshape(B, C, H, W)
    assert out.shape == (B, C, H, W)
    assert bool(jnp.allclose(out, ref)), "mismatch vs reference transpose/reshape"
    print("KERNEL_OK")
</pallas_src>

<mosaic_0001>
module attributes {stable_mosaic.version = 11 : i64} {
  func.func @_unembed_kernel(%arg0: i32, %arg1: i32, %arg2: memref<1x256x48xf32, #tpu.memory_space<vmem>>, %arg3: memref<1x48x256xf32, #tpu.memory_space<vmem>>) attributes {dimension_semantics = [#tpu.dimension_semantics<parallel>, #tpu.dimension_semantics<parallel>], iteration_bounds = array<i64: 2, 1>, scalar_prefetch = 0 : i64, scratch_operands = 0 : i64, tpu.core_type = #tpu.core_type<tc>, window_params = [{transform_indices = @transform_0, window_bounds = array<i64: 1, 256, 48>}, {transform_indices = @transform_1, window_bounds = array<i64: 1, 48, 256>}]} {
    %c0 = arith.constant 0 : index
    %c0_0 = arith.constant 0 : index
    %c0_1 = arith.constant 0 : index
    %0 = vector.load %arg2[%c0, %c0_0, %c0_1] : memref<1x256x48xf32, #tpu.memory_space<vmem>>, vector<1x256x48xf32>
    %1 = vector.shape_cast %0 : vector<1x256x48xf32> to vector<256x48xf32>
    %2 = tpu.transpose %1, [1, 0] : vector<256x48xf32> -> vector<48x256xf32>
    %c0_2 = arith.constant 0 : index
    %c0_3 = arith.constant 0 : index
    %c0_4 = arith.constant 0 : index
    %3 = vector.load %arg3[%c0_2, %c0_3, %c0_4] : memref<1x48x256xf32, #tpu.memory_space<vmem>>, vector<1x48x256xf32>
    %4 = vector.shape_cast %3 : vector<1x48x256xf32> to vector<48x256xf32>
    %5 = vector.shape_cast %2 : vector<48x256xf32> to vector<1x48x256xf32>
    tpu.vector_store %arg3[%c0_2, %c0_3, %c0_4], %5 {strides = array<i32>} : memref<1x48x256xf32, #tpu.memory_space<vmem>>, vector<1x48x256xf32>,
    return
  }
  func.func @transform_0(%arg0: i32, %arg1: i32) -> (i32, i32, i32) {
    %c0_i32 = arith.constant 0 : i32
    %c0_i32_0 = arith.constant 0 : i32
    return %arg0, %arg1, %c0_i32 : i32, i32, i32
  }
  func.func @transform_1(%arg0: i32, %arg1: i32) -> (i32, i32, i32) {
    %c0_i32 = arith.constant 0 : i32
    %c0_i32_0 = arith.constant 0 : i32
    return %arg0, %c0_i32, %arg1 : i32, i32, i32
  }
}

</mosaic_0001>

<llo_original>
// kernel: _lambda_.1
$region0: #{_lambda_.1}
  #allocation0 [shape = 'u32[]', space=smem, size = 0x4, offset = 0x4, fixed_abs, tag = 'smem constant byte address 0x4 - core index']
  #allocation1 [shape = 'u32[144,128]{1,0:T(1,128)}', space=vmem, size = 0x12000, scoped, tag = 'internal scratch']
  %s0 = inlined_call_operand.vmem [shape: f32[2,256,48], index: 0, kind: input, shape index: {}]
  %s1 = inlined_call_operand.vmem [shape: f32[2,48,256], index: 1, kind: output, shape index: {}]
  %s2 = sld [smem:[#allocation0]]
  $region37: #{_lambda_.1} parent=0
    _
  %s4 = ssub.s32 1, %s2
  %s5 = scalar_select 0, %s4, %s2
  loop: start=0, step=1, limit=4
  $region2: #{_lambda_.1} parent=0 // loop_pre_header
    _
  $region3: #{_lambda_.1} parent=0 // loop_header
    %s7 = sphi 0, %s11
    %p8 = scmp.ge.s32.totalorder %s7, 4
    %s14 = sphi 0, %s26
    %s15 = sphi 0, %s22
    %s16 = sphi 0, %s14
    %s17 = sphi 0, %s15
    %s18 = sphi 0, %s16
    %s19 = sphi 0, %s17
    %s31 = sphi 0, %s33
    %s34 = sphi 0, %s31
    %s35 = sphi 0, %s34
    %s51 = sphi 0, %s35
    %s59 = sphi 0, %s61
    %s62 = sphi 0, %s59
    %s63 = sphi 0, %s62
    %s79 = sphi 0, %s63
  $region4: #{_lambda_.1} parent=0 // loop_header_branch
    %10 = sbr.rel (%p8) target = $region8
  $region5: #{_lambda_.1} parent=0 // loop_body
    %s12 = ssub.s32 %s7, 1
    %s13 = ssub.s32 %s7, 2
    %s20 = sadd.s32 1, %s15
    %p21 = scmp.ge.s32.totalorder %s20, 1
    %s22 = scalar_select %p21, 0, %s20
    %s23 = sadd.s32 1, %s14
    %s24 = scalar_select %p21, %s23, %s14
    %p25 = scmp.ge.s32.totalorder %s24, 2
    %s26 = scalar_select %p25, 0, %s24
    %s27 = ssub.s32 %s14, %s26
    %s28 = ssub.s32 %s15, %s22
    %s29 = sor.u32 %s27, %s28
    %p30 = scmp.eq.s32.totalorder %s29, 0
    %s32 = sadd.s32 %s31, 1
    %s33 = scalar_select %p30, %s31, %s32
    %p36 = pneg %p30
    %p37 = scmp.eq.s32.totalorder %s7, 1
    %p38 = por %p36, %p37
    %p39 = scmp.ne.s32.totalorder %s31, %s34
    %p40 = scmp.eq.s32.totalorder %s7, 0
    %p41 = por %p39, %p40
    %p42 = scmp.ne.s32.totalorder %s31, %s34
    %p43 = scmp.eq.s32.totalorder %s12, 1
    %p44 = por %p42, %p43
    %p45 = scmp.ne.s32.totalorder %s34, %s35
    %p46 = scmp.eq.s32.totalorder %s12, 0
    %p47 = por %p45, %p46
    %p48 = scmp.ne.s32.totalorder %s34, %s35
    %p49 = scmp.eq.s32.totalorder %s13, 1
    %p50 = por %p48, %p49
    %p52 = scmp.ne.s32.totalorder %s35, %s51
    %p53 = scmp.eq.s32.totalorder %s13, 0
    %p54 = por %p52, %p53
    %s55 = ssub.s32 %s14, %s26
    %s56 = ssub.s32 %s15, %s22
    %s57 = sor.u32 %s55, %s56
    %p58 = scmp.eq.s32.totalorder %s57, 0
    %s60 = sadd.s32 %s59, 1
    %s61 = scalar_select %p58, %s59, %s60
    %p64 = pneg %p58
    %p65 = scmp.eq.s32.totalorder %s7, 1
    %p66 = por %p64, %p65
    %p67 = scmp.ne.s32.totalorder %s59, %s62
    %p68 = scmp.eq.s32.totalorder %s7, 0
    %p69 = por %p67, %p68
    %p70 = scmp.ne.s32.totalorder %s59, %s62
    %p71 = scmp.eq.s32.totalorder %s12, 1
    %p72 = por %p70, %p71
    %p73 = scmp.ne.s32.totalorder %s62, %s63
    %p74 = scmp.eq.s32.totalorder %s12, 0
    %p75 = por %p73, %p74
    %p76 = scmp.ne.s32.totalorder %s62, %s63
    %p77 = scmp.eq.s32.totalorder %s13, 1
    %p78 = por %p76, %p77
    %p80 = scmp.ne.s32.totalorder %s63, %s79
    %p81 = scmp.eq.s32.totalorder %s13, 0
    %p82 = por %p80, %p81
    %p83 = scmp.le.s32.totalorder 1, %s7
    %p84 = scmp.lt.s32.totalorder %s7, 3
    %p85 = pnand %p83, %p84
    %p86 = pneg %p85
    // Predicated region
    $region9: #{_lambda_.1} parent=5 // pred_check
      _
    $region10: #{_lambda_.1} parent=5 // pred_check_branch
      %88 = sbr.rel (%p85) target = $region12
    $region11: #{_lambda_.1} parent=5 // pred_region
      %s89 = ssub.s32 %s7, 1
    $region12: #{_lambda_.1} parent=5 // pred_fallthru
      _
    %p90 = scmp.lt.s32.totalorder %s7, 2
    // Predicated region
    $region13: #{_lambda_.1} parent=5 // pred_check
      %p91 = pneg %p90
    $region14: #{_lambda_.1} parent=5 // pred_check_branch
      %93 = sbr.rel (%p91) target = $region16
    $region15: #{_lambda_.1} parent=5 // pred_region
      // Predicated region
      $region17: #{_lambda_.1} parent=15 // pred_check
        %p94 = pneg %p41
      $region18: #{_lambda_.1} parent=15 // pred_check_branch
        %96 = sbr.rel (%p94) target = $region20
      $region19: #{_lambda_.1} parent=15 // pred_region
        %s97 = smul.u32 32, %s15
        %p98 = scmp.lt.s32.totalorder %s14, 1
        %s99 = scalar_select %p98, %s14, 1
        %p100 = scmp.lt.s32.totalorder %s97, 31
        %s101 = scalar_select %p100, %s97, 31
        %s102 = smul.addr %s99, 32
        %s103 = sadd.s32 %s101, %s102
        %s104 = smul.addr %s103, 8
        %s105 = scalar_lea.vmem %s0, %s104
        %s106 = smul.u32 32, %s15
      $region20: #{_lambda_.1} parent=15 // pred_fallthru
        _
    $region16: #{_lambda_.1} parent=5 // pred_fallthru
      _
    %p107 = scmp.le.s32.totalorder 1, %s7
    %p108 = scmp.lt.s32.totalorder %s7, 3
    %p109 = pnand %p107, %p108
    %p110 = pneg %p109
    // Predicated region
    $region21: #{_lambda_.1} parent=5 // pred_check
      _
    $region22: #{_lambda_.1} parent=5 // pred_check_branch
      %112 = sbr.rel (%p109) target = $region24
    $region23: #{_lambda_.1} parent=5 // pred_region
      %s113 = ssub.s32 %s7, 1
      %s114 = smul.u32 32, %s17
      %p115 = scmp.lt.s32.totalorder %s16, 1
      %s116 = scalar_select %p115, %s16, 1
      %p117 = scmp.lt.s32.totalorder %s114, 31
      %s118 = scalar_select %p117, %s114, 31
      %s119 = smul.addr %s116, 32
      %s120 = sadd.s32 %s118, %s119
      %s121 = smul.addr %s120, 8
      %s122 = scalar_lea.vmem %s0, %s121
      %p123 = pneg %p47
      %p124 = pneg %p44
      %p125 = pneg %p75
      %p126 = pneg %p72
      %s127 = smul.u32 2, %s17
      %p128 = scmp.lt.s32.totalorder %s16, 1
      %s129 = scalar_select %p128, %s16, 1
      %p130 = scmp.lt.s32.totalorder %s127, 1
      %s131 = scalar_select %p130, %s127, 1
      %s132 = smul.addr %s129, 12
      %s133 = sadd.s32 %s131, %s132
      %s134 = smul.addr %s133, 8
      %s135 = scalar_lea.vmem %s1, %s134
      %s136 = smul.u32 32, %s17
      %p137 = scmp.lt.s32.totalorder %s16, 1
      %s138 = scalar_select %p137, %s16, 1
      %p139 = scmp.lt.s32.totalorder %s136, 31
      %s140 = scalar_select %p139, %s136, 31
      %s141 = smul.addr %s138, 32
      %s142 = sadd.s32 %s140, %s141
      %s143 = smul.addr %s142, 8
      %s144 = scalar_lea.vmem %s0, %s143
      %s145 = smul.u32 32, %s17
      %s146 = smul.u32 2, %s17
      %p147 = scmp.lt.s32.totalorder %s16, 1
      %s148 = scalar_select %p147, %s16, 1
      %p149 = scmp.lt.s32.totalorder %s146, 1
      %s150 = scalar_select %p149, %s146, 1
      %s151 = smul.addr %s148, 12
      %s152 = sadd.s32 %s150, %s151
      %s153 = smul.addr %s152, 8
      %s154 = scalar_lea.vmem %s1, %s153
      %s155 = smul.u32 2, %s17
      %v156 = vld [vmem:[%s144] sm:$0xff]
      %v157 = vld [vmem:[%s144 + $0x8] sm:$0xff]
      %v158 = vld [vmem:[%s144 + $0x10] sm:$0xff]
      %v159 = vld [vmem:[%s144 + $0x18] sm:$0xff]
      %v160 = vld [vmem:[%s144 + $0x20] sm:$0xff]
      %v161 = vld [vmem:[%s144 + $0x28] sm:$0xff]
      %v162 = vld [vmem:[%s144 + $0x30] sm:$0xff]
      %v163 = vld [vmem:[%s144 + $0x38] sm:$0xff]
      %v164 = vld [vmem:[%s144 + $0x40] sm:$0xff]
      %v165 = vld [vmem:[%s144 + $0x48] sm:$0xff]
      %v166 = vld [vmem:[%s144 + $0x50] sm:$0xff]
      %v167 = vld [vmem:[%s144 + $0x58] sm:$0xff]
      %v168 = vld [vmem:[%s144 + $0x60] sm:$0xff]
      %v169 = vld [vmem:[%s144 + $0x68] sm:$0xff]
      %v170 = vld [vmem:[%s144 + $0x70] sm:$0xff]
      %v171 = vld [vmem:[%s144 + $0x78] sm:$0xff]
      %v172 = vld [vmem:[%s144 + $0x80] sm:$0xff]
      %v173 = vld [vmem:[%s144 + $0x88] sm:$0xff]
      %v174 = vld [vmem:[%s144 + $0x90] sm:$0xff]
      %v175 = vld [vmem:[%s144 + $0x98] sm:$0xff]
      %v176 = vld [vmem:[%s144 + $0xa0] sm:$0xff]
      %v177 = vld [vmem:[%s144 + $0xa8] sm:$0xff]
      %v178 = vld [vmem:[%s144 + $0xb0] sm:$0xff]
      %v179 = vld [vmem:[%s144 + $0xb8] sm:$0xff]
      %v180 = vld [vmem:[%s144 + $0xc0] sm:$0xff]
      %v181 = vld [vmem:[%s144 + $0xc8] sm:$0xff]
      %v182 = vld [vmem:[%s144 + $0xd0] sm:$0xff]
      %v183 = vld [vmem:[%s144 + $0xd8] sm:$0xff]
      %v184 = vld [vmem:[%s144 + $0xe0] sm:$0xff]
      %v185 = vld [vmem:[%s144 + $0xe8] sm:$0xff]
      %v186 = vld [vmem:[%s144 + $0xf0] sm:$0xff]
      %v187 = vld [vmem:[%s144 + $0xf8] sm:$0xff]
      %188 = vxpose.xlu0.b32.start [1/16] %v156, 128
      %189 = vxpose.xlu0.b32.cont [2/16] %v157, 128
      %190 = vxpose.xlu0.b32.cont [3/16] %v158, 128
      %191 = vxpose.xlu0.b32.cont [4/16] %v159, 128
      %192 = vxpose.xlu0.b32.cont [5/16] %v160, 128
      %193 = vxpose.xlu0.b32.cont [6/16] %v161, 128
      %194 = vxpose.xlu0.b32.cont [7/16] %v162, 128
      %195 = vxpose.xlu0.b32.cont [8/16] %v163, 128
      %196 = vxpose.xlu0.b32.cont [9/16] %v164, 128
      %197 = vxpose.xlu0.b32.cont [10/16] %v165, 128
      %198 = vxpose.xlu0.b32.cont [11/16] %v166, 128
      %199 = vxpose.xlu0.b32.cont [12/16] %v167, 128
      %200 = vxpose.xlu0.b32.cont [13/16] %v168, 128
      %201 = vxpose.xlu0.b32.cont [14/16] %v169, 128
      %202 = vxpose.xlu0.b32.cont [15/16] %v170, 128
      %203 = vxpose.xlu0.b32.end [16/16] %v171, 128
      %v204 = vpop.trf.xlu0
      %v205 = vpop.trf.xlu0
      %v206 = vpop.trf.xlu0
      %v207 = vpop.trf.xlu0
      %v208 = vpop.trf.xlu0
      %v209 = vpop.trf.xlu0
      %v210 = vpop.trf.xlu0
      %v211 = vpop.trf.xlu0
      %v212 = vpop.trf.xlu0
      %v213 = vpop.trf.xlu0
      %v214 = vpop.trf.xlu0
      %v215 = vpop.trf.xlu0
      %v216 = vpop.trf.xlu0
      %v217 = vpop.trf.xlu0
      %v218 = vpop.trf.xlu0
      %v219 = vpop.trf.xlu0
      %220 = vxpose.xlu0.b32.start [1/16] %v172, 128
      %221 = vxpose.xlu0.b32.cont [2/16] %v173, 128
      %222 = vxpose.xlu0.b32.cont [3/16] %v174, 128
      %223 = vxpose.xlu0.b32.cont [4/16] %v175, 128
      %224 = vxpose.xlu0.b32.cont [5/16] %v176, 128
      %225 = vxpose.xlu0.b32.cont [6/16] %v177, 128
      %226 = vxpose.xlu0.b32.cont [7/16] %v178, 128
      %227 = vxpose.xlu0.b32.cont [8/16] %v179, 128
      %228 = vxpose.xlu0.b32.cont [9/16] %v180, 128
      %229 = vxpose.xlu0.b32.cont [10/16] %v181, 128
      %230 = vxpose.xlu0.b32.cont [11/16] %v182, 128
      %231 = vxpose.xlu0.b32.cont [12/16] %v183, 128
      %232 = vxpose.xlu0.b32.cont [13/16] %v184, 128
      %233 = vxpose.xlu0.b32.cont [14/16] %v185, 128
      %234 = vxpose.xlu0.b32.cont [15/16] %v186, 128
      %235 = vxpose.xlu0.b32.end [16/16] %v187, 128
      %v236 = vpop.trf.xlu0
      %v237 = vpop.trf.xlu0
      %v238 = vpop.trf.xlu0
      %v239 = vpop.trf.xlu0
      %v240 = vpop.trf.xlu0
      %v241 = vpop.trf.xlu0
      %v242 = vpop.trf.xlu0
      %v243 = vpop.trf.xlu0
      %v244 = vpop.trf.xlu0
      %v245 = vpop.trf.xlu0
      %v246 = vpop.trf.xlu0
      %v247 = vpop.trf.xlu0
      %v248 = vpop.trf.xlu0
      %v249 = vpop.trf.xlu0
      %v250 = vpop.trf.xlu0
      %v251 = vpop.trf.xlu0
      %252 = vst [vmem:[%s154] sm:$0xff] %v204
      %253 = vst [vmem:[%s154 + $0x8] sm:$0xff] %v236
      %254 = vst [vmem:[%s154 + $0x10] sm:$0xff] %v205
      %255 = vst [vmem:[%s154 + $0x18] sm:$0xff] %v237
      %256 = vst [vmem:[%s154 + $0x20] sm:$0xff] %v206
      %257 = vst [vmem:[%s154 + $0x28] sm:$0xff] %v238
      %258 = vst [vmem:[%s154 + $0x30] sm:$0xff] %v207
      %259 = vst [vmem:[%s154 + $0x38] sm:$0xff] %v239
      %260 = vst [vmem:[%s154 + $0x40] sm:$0xff] %v208
      %261 = vst [vmem:[%s154 + $0x48] sm:$0xff] %v240
      %262 = vst [vmem:[%s154 + $0x50] sm:$0xff] %v209
      %263 = vst [vmem:[%s154 + $0x58] sm:$0xff] %v241
      %s264 = smul.u32 2, %s17
      %p265 = scmp.lt.s32.totalorder %s16, 1
      %s266 = scalar_select %p265, %s16, 1
      %p267 = scmp.lt.s32.totalorder %s264, 1
      %s268 = scalar_select %p267, %s264, 1
      %s269 = smul.addr %s266, 12
      %s270 = sadd.s32 %s268, %s269
      %s271 = smul.addr %s270, 8
      %s272 = scalar_lea.vmem %s1, %s271
      // Predicated region
      $region25: #{_lambda_.1} parent=23 // pred_check
        %p273 = pneg %p72
      $region26: #{_lambda_.1} parent=23 // pred_check_branch
        %275 = sbr.rel (%p273) target = $region28
      $region27: #{_lambda_.1} parent=23 // pred_region
        %s276 = smul.u32 2, %s17
      $region28: #{_lambda_.1} parent=23 // pred_fallthru
        _
    $region24: #{_lambda_.1} parent=5 // pred_fallthru
      _
    %p277 = scmp.le.s32.totalorder 2, %s7
    // Predicated region
    $region29: #{_lambda_.1} parent=5 // pred_check
      %p278 = pneg %p277
    $region30: #{_lambda_.1} parent=5 // pred_check_branch
      %280 = sbr.rel (%p278) target = $region32
    $region31: #{_lambda_.1} parent=5 // pred_region
      %s281 = ssub.s32 %s7, 2
      // Predicated region
      $region33: #{_lambda_.1} parent=31 // pred_check
        %p282 = pneg %p78
      $region34: #{_lambda_.1} parent=31 // pred_check_branch
        %284 = sbr.rel (%p282) target = $region36
      $region35: #{_lambda_.1} parent=31 // pred_region
        %s285 = smul.u32 2, %s19
        %p286 = scmp.lt.s32.totalorder %s18, 1
        %s287 = scalar_select %p286, %s18, 1
        %p288 = scmp.lt.s32.totalorder %s285, 1
        %s289 = scalar_select %p288, %s285, 1
        %s290 = smul.addr %s287, 12
        %s291 = sadd.s32 %s289, %s290
        %s292 = smul.addr %s291, 8
        %s293 = scalar_lea.vmem %s1, %s292
      $region36: #{_lambda_.1} parent=31 // pred_fallthru
        _
    $region32: #{_lambda_.1} parent=5 // pred_fallthru
      _
  $region6: #{_lambda_.1} parent=0 // loop_footer
    %s11 = sadd.s32 1, %s7
  $region7: #{_lambda_.1} parent=0 // loop_footer_branch
    %6 = sbr.rel target = $region3
  $region8: #{_lambda_.1} parent=0 // loop_exit
    _

</llo_original>
